<compile_context>
chip_gen: v7x
topology: tpu7x:2x2x1
jax: 0.10.0
libtpu: 0.0.40
codegen_flags: <defaults>
</compile_context>

<pallas_src>
import functools

import jax
import jax.numpy as jnp
import numpy as np
from jax.experimental import pallas as pl
from jax.experimental.pallas import tpu as pltpu


# ----------------------------------------------------------------------------
# Exact (erf-based) GELU, like torch.nn.GELU().  erf uses the A&S 7.1.26
# rational approximation (max abs err ~1.5e-7), built only from mul/add/exp.
def _erf(x):
    p = 0.3275911
    a1, a2, a3, a4, a5 = (0.254829592, -0.284496736, 1.421413741,
                          -1.453152027, 1.061405429)
    s = jnp.where(x >= 0.0, 1.0, -1.0)
    ax = jnp.abs(x)
    t = 1.0 / (1.0 + p * ax)
    poly = ((((a5 * t + a4) * t + a3) * t + a2) * t + a1) * t
    return s * (1.0 - poly * jnp.exp(-ax * ax))


def _gelu_exact(x):
    return 0.5 * x * (1.0 + _erf(x * 0.70710678118654752))


# -------------- kernel 1: attention MLP + softmax + weight aggregation -------
def _att_agg_kernel(emb_ref, w0_ref, b0_ref, w1_ref, b1_ref, w2_ref, b2_ref,
                    wk_ref, bk_ref, aggw_ref, aggb_ref, *, inv_t):
    """att = softmax(MLP(emb)/T); aggregated weight/bias via MXU matmuls."""
    h = jnp.dot(emb_ref[...], w0_ref[...],
                preferred_element_type=jnp.float32) + b0_ref[...]
    h = _gelu_exact(h)
    h = jnp.dot(h, w1_ref[...],
                preferred_element_type=jnp.float32) + b1_ref[...]
    h = _gelu_exact(h)
    logits = (jnp.dot(h, w2_ref[...],
                      preferred_element_type=jnp.float32) + b2_ref[...]) * inv_t
    m = jnp.max(logits, axis=-1, keepdims=True)
    e = jnp.exp(logits - m)
    att = e / jnp.sum(e, axis=-1, keepdims=True)          # (bs, K), f32

    # Hoisted aggregation: one (bs,K)x(K,Cout*Cin) MXU matmul instead of a
    # K-step VPU broadcast/accumulate loop inside the per-batch conv kernel.
    # Kept in f32: tiny + HW-invariant, so full precision is free.
    aggw_ref[...] = jnp.dot(att, wk_ref[...],
                            preferred_element_type=jnp.float32)  # (bs, Cout*Cin)
    aggb_ref[...] = jnp.dot(att, bk_ref[...],
                            preferred_element_type=jnp.float32)  # (bs, Cout)


# ------------- kernel 2: 1x1 dynamic conv, tiled over (batch, HW) ------------
def _dyn_conv_kernel(w_ref, b_ref, x_ref, o_ref):
    # w_ref: (1, Cout, Cin)   per-sample aggregated weights, f32 (HW-invariant)
    # b_ref: (1, Cout, 1)     per-sample aggregated bias, f32 (HW-invariant)
    # x_ref: (1, Cin, T_HW)   streamed in x's native dtype (no external cast)
    # o_ref: (1, Cout, T_HW)
    acc = jnp.dot(w_ref[0], x_ref[0].astype(jnp.float32),
                  preferred_element_type=jnp.float32)
    # TODO(synk): nothing to fuse here — PIANO_UNet applies MaxPool2d right
    # after encoder1 (no BN/ReLU on this output); pooling is not translated.
    o_ref[0] = (acc + b_ref[0]).astype(o_ref.dtype)


# ------------------------------ sizing helpers --------------------------------
def _pad_to(n, m):
    return ((n + m - 1) // m) * m


def _sublane_pad(rows, dtype):
    """Rows padded to the sublane multiple for this dtype (8 for f32, 16 bf16)."""
    mult = max(1, 32 // (jnp.dtype(dtype).itemsize * 8)) * 8
    return _pad_to(rows, mult)


def _vmem_capacity_bytes():
    try:
        return int(pltpu.get_tpu_info().vmem_capacity_bytes)
    except Exception:
        return 64 * 1024 * 1024      # conservative fallback (v7x per-TC)


def _choose_tile_hw(hw, per_col_bytes, budget_bytes, cap=4096, min_steps=4):
    """Lane-aligned HW tile: big for DMA efficiency, small enough to fit the
    double-buffered VMEM budget, and capped so the pipeline gets several
    steps (read/compute/write overlap)."""
    if hw <= 128:
        return hw                                  # must cover the full lane dim
    max_cols = max(128, budget_bytes // max(per_col_bytes, 1))
    tile = min(hw, cap, max_cols)
    tile = max(128, (tile // 128) * 128)
    # Shrink until >= min_steps pipeline steps, but not below the ~85%-of-
    # roofline region (>= 512 columns, measured tile sweep).
    while tile > 512 and pl.cdiv(hw, tile) < min_steps:
        tile = max(512, ((tile // 2) // 128) * 128)
    # Even tiny problems want >= 2 steps so read/write DMA overlap.
    if pl.cdiv(hw, tile) < 2 and tile > 128:
        tile = max(128, (((tile + 1) // 2) // 128) * 128)
    return tile


# ---------------------------------- wrapper -----------------------------------
def dynamic_conv_forward(x, embedding, params, *, K, T,
                         out_dtype=None, tile_hw=None):
    """DynamicConv forward (ks=1, stride=1, padding=0, groups=1). x is NCHW."""
    bs, in_c, H, W = x.shape
    out_c = params["conv_w"].shape[1]
    hw = H * W
    out_dtype = x.dtype if out_dtype is None else out_dtype

    # ---- kernel 1: att MLP + softmax + (att @ W_flat) aggregation ----------
    fc0_w = params["fc0_w"].T                      # (d_embds, 128)
    fc0_b = params["fc0_b"][None, :]
    fc1_w = params["fc1_w"].T                      # (128, 128)
    fc1_b = params["fc1_b"][None, :]
    fc2_w = params["fc2_w"].T                      # (128, K)
    fc2_b = params["fc2_b"][None, :]
    w_flat = params["conv_w"].reshape(K, out_c * in_c)    # ks=1 -> drop 1x1
    b_k = params["conv_b"]                                # (K, Cout)

    agg_w_flat, agg_b = pl.pallas_call(
        functools.partial(_att_agg_kernel, inv_t=1.0 / T),
        out_shape=(
            jax.ShapeDtypeStruct((bs, out_c * in_c), jnp.float32),
            jax.ShapeDtypeStruct((bs, out_c), jnp.float32),
        ),
        in_specs=[pl.BlockSpec(memory_space=pltpu.MemorySpace.VMEM)] * 9,
        out_specs=(pl.BlockSpec(memory_space=pltpu.MemorySpace.VMEM),
                   pl.BlockSpec(memory_space=pltpu.MemorySpace.VMEM)),
    )(embedding.astype(jnp.float32), fc0_w, fc0_b, fc1_w, fc1_b, fc2_w, fc2_b,
      w_flat, b_k)

    # Tiny XLA reshapes of the aggregated params (bs*Cout*Cin floats).
    agg_w = agg_w_flat.reshape(bs, out_c, in_c)            # f32
    agg_b3 = agg_b.reshape(bs, out_c, 1)                   # f32

    # ---- kernel 2: per-sample (Cout,Cin) @ (Cin,T_HW) + bias, tiled --------
    # No .astype() here: x is streamed in its native dtype (no extra HBM pass).
    x_flat = x.reshape(bs, in_c, hw)                       # contiguous, no copy

    x_item = jnp.dtype(x_flat.dtype).itemsize
    o_item = jnp.dtype(out_dtype).itemsize
    in_rows = _sublane_pad(in_c, x_flat.dtype)             # sublane padding
    out_rows = _sublane_pad(out_c, out_dtype)
    agg_rows = _sublane_pad(out_c, jnp.float32)

    # Generation-aware budget / limit.
    vmem_cap = _vmem_capacity_bytes()
    if vmem_cap >= 96 * 1024 * 1024:        # v5e / v6e: 128 MiB per TensorCore
        tile_budget = 24 * 1024 * 1024
        limit_cap = 96 * 1024 * 1024
    else:                                   # v7x: 64 MiB per TensorCore
        tile_budget = 12 * 1024 * 1024
        limit_cap = 48 * 1024 * 1024

    per_col = 2 * (in_rows * x_item + out_rows * o_item)   # x + out, 2-buffered
    tile = tile_hw if tile_hw is not None else _choose_tile_hw(
        hw, per_col, tile_budget)
    n_hw = pl.cdiv(hw, tile)

    # Padding-aware VMEM estimate: double-buffered x/out tiles plus the small
    # (but still double-buffered) agg_w/agg_b blocks, plus scratch headroom.
    agg_block_bytes = 2 * (agg_rows * _pad_to(in_c, 128) * 4
                           + agg_rows * 128 * 4)
    step_bytes = per_col * tile + agg_block_bytes
    vmem_limit = int(min(max(step_bytes + 8 * 1024 * 1024, 32 * 1024 * 1024),
                         limit_cap))

    grid_spec = pltpu.PrefetchScalarGridSpec(
        num_scalar_prefetch=0,
        grid=(bs, n_hw),
        in_specs=[
            pl.BlockSpec((1, out_c, in_c), lambda b, t: (b, 0, 0)),   # agg_w
            pl.BlockSpec((1, out_c, 1), lambda b, t: (b, 0, 0)),      # agg_b
            pl.BlockSpec((1, in_c, tile), lambda b, t: (b, 0, t)),    # x
        ],
        out_specs=pl.BlockSpec((1, out_c, tile), lambda b, t: (b, 0, t)),
    )
    out = pl.pallas_call(
        _dyn_conv_kernel,
        out_shape=jax.ShapeDtypeStruct((bs, out_c, hw), out_dtype),
        grid_spec=grid_spec,
        compiler_params=pltpu.CompilerParams(
            dimension_semantics=("parallel", "parallel"),
            vmem_limit_bytes=vmem_limit),
    )(agg_w, agg_b3, x_flat)

    return out.reshape(bs, out_c, H, W)


# ------------------------------ parameter init --------------------------------
def init_params(key, *, K, d_embds, in_c, out_c, ks=1):
    keys = jax.random.split(key, 8)

    def linear(kw, kb, fan_in, fan_out):
        bound = 1.0 / np.sqrt(fan_in)
        w = jax.random.uniform(kw, (fan_out, fan_in), jnp.float32, -bound, bound)
        b = jax.random.uniform(kb, (fan_out,), jnp.float32, -bound, bound)
        return w, b

    fc0_w, fc0_b = linear(keys[0], keys[1], d_embds, 128)
    fc1_w, fc1_b = linear(keys[2], keys[3], 128, 128)
    fc2_w, fc2_b = linear(keys[4], keys[5], 128, K)

    # conv weight: kaiming_uniform_ per expert (fan_in = in_c * ks * ks, a=0)
    fan_in = in_c * ks * ks
    bound = float(np.sqrt(6.0 / fan_in))
    conv_w = jax.random.uniform(keys[6], (K, out_c, in_c, ks, ks),
                                jnp.float32, -bound, bound)
    # bias stays torch.randn init in the module
    conv_b = jax.random.normal(keys[7], (K, out_c), jnp.float32)

    return dict(fc0_w=fc0_w, fc0_b=fc0_b, fc1_w=fc1_w, fc1_b=fc1_b,
                fc2_w=fc2_w, fc2_b=fc2_b, conv_w=conv_w, conv_b=conv_b)


# ----------------------------- pure-JAX reference ------------------------------
def reference_forward(x, embedding, params, *, K, T):
    bs, in_c, H, W = x.shape
    out_c = params["conv_w"].shape[1]
    h = embedding @ params["fc0_w"].T + params["fc0_b"]
    h = _gelu_exact(h)
    h = h @ params["fc1_w"].T + params["fc1_b"]
    h = _gelu_exact(h)
    att = jax.nn.softmax((h @ params["fc2_w"].T + params["fc2_b"]) / T, axis=-1)
    agg_w = (att @ params["conv_w"].reshape(K, -1)).reshape(bs, out_c, in_c)
    agg_b = att @ params["conv_b"]                         # (bs, out_c)
    out = jnp.einsum("boi,bihw->bohw", agg_w, x) + agg_b[:, :, None, None]
    return out


# -------------------------------------- main -----------------------------------
if __name__ == "__main__":
    # Shapes consistent with PIANO_UNet(K=4, T=10.0, d_embds=256, w=20,
    # init_features=32) encoder1, at a small 16x16 spatial size.
    bs = 2
    in_c = 20
    out_c = 32
    H = W = 16
    K, T, d_embds = 4, 10.0, 256

    root = jax.random.PRNGKey(0)
    k_x, k_e, k_p = jax.random.split(root, 3)

    x = jax.random.normal(k_x, (bs, in_c, H, W), jnp.float32)
    embedding = jax.random.normal(k_e, (bs, d_embds), jnp.float32)
    params = init_params(k_p, K=K, d_embds=d_embds, in_c=in_c, out_c=out_c)

    ref = jax.block_until_ready(reference_forward(x, embedding, params, K=K, T=T))

    # f32 output path (module semantics): tight correctness check.
    out_f32 = jax.block_until_ready(
        dynamic_conv_forward(x, embedding, params, K=K, T=T))
    assert out_f32.shape == (bs, out_c, H, W), out_f32.shape
    np.testing.assert_allclose(np.asarray(out_f32), np.asarray(ref),
                               rtol=2e-4, atol=2e-4)

    # bf16-output streaming path: only the store is quantized (weights stay
    # f32), so the tolerance just covers bf16 rounding of the result.
    out_bf16 = jax.block_until_ready(
        dynamic_conv_forward(x, embedding, params, K=K, T=T,
                             out_dtype=jnp.bfloat16))
    assert out_bf16.shape == (bs, out_c, H, W), out_bf16.shape
    np.testing.assert_allclose(np.asarray(out_bf16.astype(jnp.float32)),
                               np.asarray(ref), rtol=2e-2, atol=5e-2)

    print("KERNEL_OK")
</pallas_src>

<mosaic_0001>
module attributes {stable_mosaic.version = 11 : i64} {
  func.func @_att_agg_kernel(%arg0: memref<2x256xf32, #tpu.memory_space<vmem>>, %arg1: memref<256x128xf32, #tpu.memory_space<vmem>>, %arg2: memref<1x128xf32, #tpu.memory_space<vmem>>, %arg3: memref<128x128xf32, #tpu.memory_space<vmem>>, %arg4: memref<1x128xf32, #tpu.memory_space<vmem>>, %arg5: memref<128x4xf32, #tpu.memory_space<vmem>>, %arg6: memref<1x4xf32, #tpu.memory_space<vmem>>, %arg7: memref<4x640xf32, #tpu.memory_space<vmem>>, %arg8: memref<4x32xf32, #tpu.memory_space<vmem>>, %arg9: memref<2x640xf32, #tpu.memory_space<vmem>>, %arg10: memref<2x32xf32, #tpu.memory_space<vmem>>) attributes {dimension_semantics = [], scalar_prefetch = 0 : i64, scratch_operands = 0 : i64, tpu.core_type = #tpu.core_type<tc>} {
    %c0 = arith.constant 0 : index
    %c0_0 = arith.constant 0 : index
    %0 = vector.load %arg0[%c0, %c0_0] : memref<2x256xf32, #tpu.memory_space<vmem>>, vector<2x256xf32>
    %c0_1 = arith.constant 0 : index
    %c0_2 = arith.constant 0 : index
    %1 = vector.load %arg1[%c0_1, %c0_2] : memref<256x128xf32, #tpu.memory_space<vmem>>, vector<256x128xf32>
    %cst = arith.constant dense<0.000000e+00> : vector<2x128xf32>
    %2 = tpu.matmul %0, %1, %cst {dimension_numbers = #tpu.dot_dimension_numbers<[1], [0], [0], [1], [0, 0, 1, 1], [], []>} : vector<2x256xf32>, vector<256x128xf32>, vector<2x128xf32> -> vector<2x128xf32>
    %c0_3 = arith.constant 0 : index
    %c0_4 = arith.constant 0 : index
    %3 = vector.load %arg2[%c0_3, %c0_4] : memref<1x128xf32, #tpu.memory_space<vmem>>, vector<1x128xf32>
    %4 = vector.broadcast %3 : vector<1x128xf32> to vector<2x128xf32>
    %5 = arith.addf %2, %4 : vector<2x128xf32>
    %cst_5 = arith.constant 5.000000e-01 : f32
    %6 = vector.broadcast %cst_5 : f32 to vector<2x128xf32>
    %7 = arith.mulf %6, %5 : vector<2x128xf32>
    %cst_6 = arith.constant 0.707106769 : f32
    %8 = vector.broadcast %cst_6 : f32 to vector<2x128xf32>
    %9 = arith.mulf %5, %8 : vector<2x128xf32>
    %cst_7 = arith.constant 0.000000e+00 : f32
    %10 = vector.broadcast %cst_7 : f32 to vector<2x128xf32>
    %11 = arith.cmpf oge, %9, %10 : vector<2x128xf32>
    %cst_8 = arith.constant 1.000000e+00 : f32
    %cst_9 = arith.constant -1.000000e+00 : f32
    %12 = vector.broadcast %cst_8 : f32 to vector<2x128xf32>
    %13 = vector.broadcast %cst_9 : f32 to vector<2x128xf32>
    %14 = arith.select %11, %12, %13 : vector<2x128xi1>, vector<2x128xf32>
    %15 = math.absf %9 : vector<2x128xf32>
    %cst_10 = arith.constant 0.327591091 : f32
    %16 = vector.broadcast %cst_10 : f32 to vector<2x128xf32>
    %17 = arith.mulf %16, %15 : vector<2x128xf32>
    %cst_11 = arith.constant 1.000000e+00 : f32
    %18 = vector.broadcast %cst_11 : f32 to vector<2x128xf32>
    %19 = arith.addf %18, %17 : vector<2x128xf32>
    %cst_12 = arith.constant 1.000000e+00 : f32
    %20 = vector.broadcast %cst_12 : f32 to vector<2x128xf32>
    %21 = arith.divf %20, %19 : vector<2x128xf32>
    %cst_13 = arith.constant 1.06140542 : f32
    %22 = vector.broadcast %cst_13 : f32 to vector<2x128xf32>
    %23 = arith.mulf %22, %21 : vector<2x128xf32>
    %cst_14 = arith.constant -1.45315206 : f32
    %24 = vector.broadcast %cst_14 : f32 to vector<2x128xf32>
    %25 = arith.addf %23, %24 : vector<2x128xf32>
    %26 = arith.mulf %25, %21 : vector<2x128xf32>
    %cst_15 = arith.constant 1.42141378 : f32
    %27 = vector.broadcast %cst_15 : f32 to vector<2x128xf32>
    %28 = arith.addf %26, %27 : vector<2x128xf32>
    %29 = arith.mulf %28, %21 : vector<2x128xf32>
    %cst_16 = arith.constant -0.284496725 : f32
    %30 = vector.broadcast %cst_16 : f32 to vector<2x128xf32>
    %31 = arith.addf %29, %30 : vector<2x128xf32>
    %32 = arith.mulf %31, %21 : vector<2x128xf32>
    %cst_17 = arith.constant 0.254829586 : f32
    %33 = vector.broadcast %cst_17 : f32 to vector<2x128xf32>
    %34 = arith.addf %32, %33 : vector<2x128xf32>
    %35 = arith.mulf %34, %21 : vector<2x128xf32>
    %cst_18 = arith.constant 0.000000e+00 : f32
    %36 = vector.broadcast %cst_18 : f32 to vector<2x128xf32>
    %37 = arith.subf %36, %15 : vector<2x128xf32>
    %38 = arith.mulf %37, %15 : vector<2x128xf32>
    %39 = math.exp %38 : vector<2x128xf32>
    %40 = arith.mulf %35, %39 : vector<2x128xf32>
    %cst_19 = arith.constant 1.000000e+00 : f32
    %41 = vector.broadcast %cst_19 : f32 to vector<2x128xf32>
    %42 = arith.subf %41, %40 : vector<2x128xf32>
    %43 = arith.mulf %14, %42 : vector<2x128xf32>
    %cst_20 = arith.constant 1.000000e+00 : f32
    %44 = vector.broadcast %cst_20 : f32 to vector<2x128xf32>
    %45 = arith.addf %44, %43 : vector<2x128xf32>
    %46 = arith.mulf %7, %45 : vector<2x128xf32>
    %c0_21 = arith.constant 0 : index
    %c0_22 = arith.constant 0 : index
    %47 = vector.load %arg3[%c0_21, %c0_22] : memref<128x128xf32, #tpu.memory_space<vmem>>, vector<128x128xf32>
    %cst_23 = arith.constant dense<0.000000e+00> : vector<2x128xf32>
    %48 = tpu.matmul %46, %47, %cst_23 {dimension_numbers = #tpu.dot_dimension_numbers<[1], [0], [0], [1], [0, 0, 1, 1], [], []>} : vector<2x128xf32>, vector<128x128xf32>, vector<2x128xf32> -> vector<2x128xf32>
    %c0_24 = arith.constant 0 : index
    %c0_25 = arith.constant 0 : index
    %49 = vector.load %arg4[%c0_24, %c0_25] : memref<1x128xf32, #tpu.memory_space<vmem>>, vector<1x128xf32>
    %50 = vector.broadcast %49 : vector<1x128xf32> to vector<2x128xf32>
    %51 = arith.addf %48, %50 : vector<2x128xf32>
    %cst_26 = arith.constant 5.000000e-01 : f32
    %52 = vector.broadcast %cst_26 : f32 to vector<2x128xf32>
    %53 = arith.mulf %52, %51 : vector<2x128xf32>
    %cst_27 = arith.constant 0.707106769 : f32
    %54 = vector.broadcast %cst_27 : f32 to vector<2x128xf32>
    %55 = arith.mulf %51, %54 : vector<2x128xf32>
    %cst_28 = arith.constant 0.000000e+00 : f32
    %56 = vector.broadcast %cst_28 : f32 to vector<2x128xf32>
    %57 = arith.cmpf oge, %55, %56 : vector<2x128xf32>
    %cst_29 = arith.constant 1.000000e+00 : f32
    %cst_30 = arith.constant -1.000000e+00 : f32
    %58 = vector.broadcast %cst_29 : f32 to vector<2x128xf32>
    %59 = vector.broadcast %cst_30 : f32 to vector<2x128xf32>
    %60 = arith.select %57, %58, %59 : vector<2x128xi1>, vector<2x128xf32>
    %61 = math.absf %55 : vector<2x128xf32>
    %cst_31 = arith.constant 0.327591091 : f32
    %62 = vector.broadcast %cst_31 : f32 to vector<2x128xf32>
    %63 = arith.mulf %62, %61 : vector<2x128xf32>
    %cst_32 = arith.constant 1.000000e+00 : f32
    %64 = vector.broadcast %cst_32 : f32 to vector<2x128xf32>
    %65 = arith.addf %64, %63 : vector<2x128xf32>
    %cst_33 = arith.constant 1.000000e+00 : f32
    %66 = vector.broadcast %cst_33 : f32 to vector<2x128xf32>
    %67 = arith.divf %66, %65 : vector<2x128xf32>
    %cst_34 = arith.constant 1.06140542 : f32
    %68 = vector.broadcast %cst_34 : f32 to vector<2x128xf32>
    %69 = arith.mulf %68, %67 : vector<2x128xf32>
    %cst_35 = arith.constant -1.45315206 : f32
    %70 = vector.broadcast %cst_35 : f32 to vector<2x128xf32>
    %71 = arith.addf %69, %70 : vector<2x128xf32>
    %72 = arith.mulf %71, %67 : vector<2x128xf32>
    %cst_36 = arith.constant 1.42141378 : f32
    %73 = vector.broadcast %cst_36 : f32 to vector<2x128xf32>
    %74 = arith.addf %72, %73 : vector<2x128xf32>
    %75 = arith.mulf %74, %67 : vector<2x128xf32>
    %cst_37 = arith.constant -0.284496725 : f32
    %76 = vector.broadcast %cst_37 : f32 to vector<2x128xf32>
    %77 = arith.addf %75, %76 : vector<2x128xf32>
    %78 = arith.mulf %77, %67 : vector<2x128xf32>
    %cst_38 = arith.constant 0.254829586 : f32
    %79 = vector.broadcast %cst_38 : f32 to vector<2x128xf32>
    %80 = arith.addf %78, %79 : vector<2x128xf32>
    %81 = arith.mulf %80, %67 : vector<2x128xf32>
    %cst_39 = arith.constant 0.000000e+00 : f32
    %82 = vector.broadcast %cst_39 : f32 to vector<2x128xf32>
    %83 = arith.subf %82, %61 : vector<2x128xf32>
    %84 = arith.mulf %83, %61 : vector<2x128xf32>
    %85 = math.exp %84 : vector<2x128xf32>
    %86 = arith.mulf %81, %85 : vector<2x128xf32>
    %cst_40 = arith.constant 1.000000e+00 : f32
    %87 = vector.broadcast %cst_40 : f32 to vector<2x128xf32>
    %88 = arith.subf %87, %86 : vector<2x128xf32>
    %89 = arith.mulf %60, %88 : vector<2x128xf32>
    %cst_41 = arith.constant 1.000000e+00 : f32
    %90 = vector.broadcast %cst_41 : f32 to vector<2x128xf32>
    %91 = arith.addf %90, %89 : vector<2x128xf32>
    %92 = arith.mulf %53, %91 : vector<2x128xf32>
    %c0_42 = arith.constant 0 : index
    %c0_43 = arith.constant 0 : index
    %93 = vector.load %arg5[%c0_42, %c0_43] : memref<128x4xf32, #tpu.memory_space<vmem>>, vector<128x4xf32>
    %cst_44 = arith.constant dense<0.000000e+00> : vector<2x4xf32>
    %94 = tpu.matmul %92, %93, %cst_44 {dimension_numbers = #tpu.dot_dimension_numbers<[1], [0], [0], [1], [0, 0, 1, 1], [], []>} : vector<2x128xf32>, vector<128x4xf32>, vector<2x4xf32> -> vector<2x4xf32>
    %c0_45 = arith.constant 0 : index
    %c0_46 = arith.constant 0 : index
    %95 = vector.load %arg6[%c0_45, %c0_46] : memref<1x4xf32, #tpu.memory_space<vmem>>, vector<1x4xf32>
    %96 = vector.broadcast %95 : vector<1x4xf32> to vector<2x4xf32>
    %97 = arith.addf %94, %96 : vector<2x4xf32>
    %cst_47 = arith.constant 1.000000e-01 : f32
    %98 = vector.broadcast %cst_47 : f32 to vector<2x4xf32>
    %99 = arith.mulf %97, %98 : vector<2x4xf32>
    %cst_48 = arith.constant dense<0xFF800000> : vector<2xf32>
    %100 = vector.multi_reduction <maximumf>, %99, %cst_48 [1] : vector<2x4xf32> to vector<2xf32>
    %101 = vector.shape_cast %100 : vector<2xf32> to vector<2x1xf32>
    %102 = vector.broadcast %101 : vector<2x1xf32> to vector<2x4xf32>
    %103 = arith.subf %99, %102 : vector<2x4xf32>
    %104 = math.exp %103 : vector<2x4xf32>
    %cst_49 = arith.constant dense<0.000000e+00> : vector<2xf32>
    %105 = vector.multi_reduction <add>, %104, %cst_49 [1] : vector<2x4xf32> to vector<2xf32>
    %106 = vector.shape_cast %105 : vector<2xf32> to vector<2x1xf32>
    %107 = vector.broadcast %106 : vector<2x1xf32> to vector<2x4xf32>
    %108 = arith.divf %104, %107 : vector<2x4xf32>
    %c0_50 = arith.constant 0 : index
    %c0_51 = arith.constant 0 : index
    %109 = vector.load %arg7[%c0_50, %c0_51] : memref<4x640xf32, #tpu.memory_space<vmem>>, vector<4x640xf32>
    %cst_52 = arith.constant dense<0.000000e+00> : vector<2x640xf32>
    %110 = tpu.matmul %108, %109, %cst_52 {dimension_numbers = #tpu.dot_dimension_numbers<[1], [0], [0], [1], [0, 0, 1, 1], [], []>} : vector<2x4xf32>, vector<4x640xf32>, vector<2x640xf32> -> vector<2x640xf32>
    %c0_53 = arith.constant 0 : index
    %c0_54 = arith.constant 0 : index
    %111 = vector.load %arg9[%c0_53, %c0_54] : memref<2x640xf32, #tpu.memory_space<vmem>>, vector<2x640xf32>
    tpu.vector_store %arg9[%c0_53, %c0_54], %110 {strides = array<i32>} : memref<2x640xf32, #tpu.memory_space<vmem>>, vector<2x640xf32>,
    %c0_55 = arith.constant 0 : index
    %c0_56 = arith.constant 0 : index
    %112 = vector.load %arg8[%c0_55, %c0_56] : memref<4x32xf32, #tpu.memory_space<vmem>>, vector<4x32xf32>
    %cst_57 = arith.constant dense<0.000000e+00> : vector<2x32xf32>
    %113 = tpu.matmul %108, %112, %cst_57 {dimension_numbers = #tpu.dot_dimension_numbers<[1], [0], [0], [1], [0, 0, 1, 1], [], []>} : vector<2x4xf32>, vector<4x32xf32>, vector<2x32xf32> -> vector<2x32xf32>
    %c0_58 = arith.constant 0 : index
    %c0_59 = arith.constant 0 : index
    %114 = vector.load %arg10[%c0_58, %c0_59] : memref<2x32xf32, #tpu.memory_space<vmem>>, vector<2x32xf32>
    tpu.vector_store %arg10[%c0_58, %c0_59], %113 {strides = array<i32>} : memref<2x32xf32, #tpu.memory_space<vmem>>, vector<2x32xf32>,
    return
  }
}

</mosaic_0001>

<llo_original>
// kernel: tpu_custom_call.1
$region0: #{tpu_custom_call.1}
  #allocation0 [shape = 'u32[]', space=smem, size = 0x4, offset = 0x4, fixed_abs, tag = 'smem constant byte address 0x4 - core index']
  #allocation1 [shape = 'u32[144,128]{1,0:T(1,128)}', space=vmem, size = 0x12000, scoped, tag = 'internal scratch']
  %s0 = inlined_call_operand.hbm [shape: f32[2,256], index: 0, kind: input, shape index: {}]
  %s1 = inlined_call_operand.hbm [shape: f32[256,128], index: 1, kind: input, shape index: {}]
  %s2 = inlined_call_operand.vmem [shape: f32[1,128], index: 2, kind: input, shape index: {}]
  %s3 = inlined_call_operand.vmem [shape: f32[128,128], index: 3, kind: input, shape index: {}]
  %s4 = inlined_call_operand.vmem [shape: f32[1,128], index: 4, kind: input, shape index: {}]
  %s5 = inlined_call_operand.vmem [shape: f32[128,4], index: 5, kind: input, shape index: {}]
  %s6 = inlined_call_operand.hbm [shape: f32[1,4], index: 6, kind: input, shape index: {}]
  %s7 = inlined_call_operand.vmem [shape: f32[4,640], index: 7, kind: input, shape index: {}]
  %s8 = inlined_call_operand.vmem [shape: f32[4,32], index: 8, kind: input, shape index: {}]
  %s9 = inlined_call_operand.hbm [shape: f32[2,640], index: 9, kind: output, shape index: {0}]
  %s10 = inlined_call_operand.hbm [shape: f32[2,32], index: 10, kind: output, shape index: {1}]
  %11 = xla_tuple %s9, %s10
  %s12 = sld [smem:[#allocation0]]
  $region66: #{tpu_custom_call.1} parent=0
    _
  %s14 = ssub.s32 1, %s12
  %s15 = scalar_select 0, %s14, %s12
  $region1: #{tpu_custom_call.1} parent=0
    #allocation2 [shape = 'u8[2048]{0}', space=vmem, size = 0x800, scoped, tag = 'input window, operand 0, single buffered']
    #allocation3 [shape = 's32[1]{0}', space=sflag, size = 0x4, scoped, tag = 'scoped memory for tpu_custom_call.1']
    #allocation4 [shape = 's32[1]{0}', space=sflag, size = 0x4, scoped, tag = 'scoped memory for tpu_custom_call.1']
    #allocation5 [shape = 'u8[131072]{0}', space=vmem, size = 0x20000, scoped, tag = 'input window, operand 1, single buffered']
    #allocation6 [shape = 's32[1]{0}', space=sflag, size = 0x4, scoped, tag = 'scoped memory for tpu_custom_call.1']
    #allocation7 [shape = 'u8[512]{0}', space=vmem, size = 0x400, scoped, tag = 'input window, operand 6, single buffered']
    #allocation8 [shape = 'u8[5120]{0}', space=vmem, size = 0x1400, scoped, tag = 'output window, operand 0, single buffered']
    #allocation9 [shape = 'u8[1024]{0}', space=vmem, size = 0x400, scoped, tag = 'output window, operand 1, single buffered']
    #allocation10 [shape = 's32[1]{0}', space=sflag, size = 0x4, scoped, tag = 'scoped memory for tpu_custom_call.1']
    %16 = vsyncpa [#allocation3], 0
    %17 = vsyncpa [#allocation6], 0
    %18 = vsyncpa [#allocation4], 0
    %19 = vsyncpa [#allocation10], 0
    // Predicated region
    $region2: #{tpu_custom_call.1} parent=1 // pred_check
      _
    $region3: #{tpu_custom_call.1} parent=1 // pred_check_branch
      %21 = sbr.rel (0) target = $region5
    $region4: #{tpu_custom_call.1} parent=1 // pred_region
      %s23 = ssub.s32 64, 64
      %24 = vsyncadd [#allocation3], %s23
      %s26 = sshll.u32 [#allocation2], 4
      %s27 = int_to_ptr.vmem [resolvable:$true] %s26
      %29 = dma.hbm_to_vmem [thread:$0]  %s0, 64, %s27, [#allocation3]
    $region5: #{tpu_custom_call.1} parent=1 // pred_fallthru
      _
    // Predicated region
    $region6: #{tpu_custom_call.1} parent=1 // pred_check
      _
    $region7: #{tpu_custom_call.1} parent=1 // pred_check_branch
      %31 = sbr.rel (0) target = $region9
    $region8: #{tpu_custom_call.1} parent=1 // pred_region
      %s33 = ssub.s32 4096, 4096
      %34 = vsyncadd [#allocation6], %s33
      %s35 = sshll.u32 [#allocation5], 4
      %s36 = int_to_ptr.vmem [resolvable:$true] %s35
      %41 = dma.hbm_to_vmem [thread:$0]  %s1, 4096, %s36, [#allocation6], 128, 128, 8
    $region9: #{tpu_custom_call.1} parent=1 // pred_fallthru
      _
    // Predicated region
    $region10: #{tpu_custom_call.1} parent=1 // pred_check
      _
    $region11: #{tpu_custom_call.1} parent=1 // pred_check_branch
      %43 = sbr.rel (0) target = $region13
    $region12: #{tpu_custom_call.1} parent=1 // pred_region
      _
    $region13: #{tpu_custom_call.1} parent=1 // pred_fallthru
      _
    // Predicated region
    $region14: #{tpu_custom_call.1} parent=1 // pred_check
      _
    $region15: #{tpu_custom_call.1} parent=1 // pred_check_branch
      %45 = sbr.rel (0) target = $region17
    $region16: #{tpu_custom_call.1} parent=1 // pred_region
      _
    $region17: #{tpu_custom_call.1} parent=1 // pred_fallthru
      _
    // Predicated region
    $region18: #{tpu_custom_call.1} parent=1 // pred_check
      _
    $region19: #{tpu_custom_call.1} parent=1 // pred_check_branch
      %47 = sbr.rel (0) target = $region21
    $region20: #{tpu_custom_call.1} parent=1 // pred_region
      _
    $region21: #{tpu_custom_call.1} parent=1 // pred_fallthru
      _
    // Predicated region
    $region22: #{tpu_custom_call.1} parent=1 // pred_check
      _
    $region23: #{tpu_custom_call.1} parent=1 // pred_check_branch
      %49 = sbr.rel (0) target = $region25
    $region24: #{tpu_custom_call.1} parent=1 // pred_region
      _
    $region25: #{tpu_custom_call.1} parent=1 // pred_fallthru
      _
    // Predicated region
    $region26: #{tpu_custom_call.1} parent=1 // pred_check
      _
    $region27: #{tpu_custom_call.1} parent=1 // pred_check_branch
      %51 = sbr.rel (0) target = $region29
    $region28: #{tpu_custom_call.1} parent=1 // pred_region
      %s53 = ssub.s32 16, 16
      %54 = vsyncadd [#allocation6], %s53
      %s56 = sshll.u32 [#allocation7], 4
      %s57 = int_to_ptr.vmem [resolvable:$true] %s56
      %59 = dma.hbm_to_vmem [thread:$0]  %s6, 16, %s57, [#allocation6]
    $region29: #{tpu_custom_call.1} parent=1 // pred_fallthru
      _
    // Predicated region
    $region30: #{tpu_custom_call.1} parent=1 // pred_check
      _
    $region31: #{tpu_custom_call.1} parent=1 // pred_check_branch
      %61 = sbr.rel (0) target = $region33
    $region32: #{tpu_custom_call.1} parent=1 // pred_region
      _
    $region33: #{tpu_custom_call.1} parent=1 // pred_fallthru
      _
    // Predicated region
    $region34: #{tpu_custom_call.1} parent=1 // pred_check
      _
    $region35: #{tpu_custom_call.1} parent=1 // pred_check_branch
      %63 = sbr.rel (0) target = $region37
    $region36: #{tpu_custom_call.1} parent=1 // pred_region
      _
    $region37: #{tpu_custom_call.1} parent=1 // pred_fallthru
      _
    // Predicated region
    $region38: #{tpu_custom_call.1} parent=1 // pred_check
      _
    $region39: #{tpu_custom_call.1} parent=1 // pred_check_branch
      %65 = sbr.rel (0) target = $region41
    $region40: #{tpu_custom_call.1} parent=1 // pred_region
      %66 = dma.done [#allocation3], 64
    $region41: #{tpu_custom_call.1} parent=1 // pred_fallthru
      _
    // Predicated region
    $region42: #{tpu_custom_call.1} parent=1 // pred_check
      _
    $region43: #{tpu_custom_call.1} parent=1 // pred_check_branch
      %68 = sbr.rel (0) target = $region45
    $region44: #{tpu_custom_call.1} parent=1 // pred_region
      %69 = dma.done [#allocation6], 4096
    $region45: #{tpu_custom_call.1} parent=1 // pred_fallthru
      _
    // Predicated region
    $region46: #{tpu_custom_call.1} parent=1 // pred_check
      _
    $region47: #{tpu_custom_call.1} parent=1 // pred_check_branch
      %71 = sbr.rel (0) target = $region49
    $region48: #{tpu_custom_call.1} parent=1 // pred_region
      %72 = dma.done [#allocation6], 16
    $region49: #{tpu_custom_call.1} parent=1 // pred_fallthru
      _
    %v73 = vld [vmem:[#allocation2] sm:$0xf]
    %v74 = vld [vmem:[#allocation5] sm:$0xff]
    %v75 = vld [vmem:[#allocation5 + $0x8] sm:$0xff]
    %v76 = vld [vmem:[#allocation5 + $0x10] sm:$0xff]
    %v77 = vld [vmem:[#allocation5 + $0x18] sm:$0xff]
    %v78 = vld [vmem:[#allocation5 + $0x20] sm:$0xff]
    %v79 = vld [vmem:[#allocation5 + $0x28] sm:$0xff]
    %v80 = vld [vmem:[#allocation5 + $0x30] sm:$0xff]
    %v81 = vld [vmem:[#allocation5 + $0x38] sm:$0xff]
    %v82 = vld [vmem:[#allocation5 + $0x40] sm:$0xff]
    %v83 = vld [vmem:[#allocation5 + $0x48] sm:$0xff]
    %v84 = vld [vmem:[#allocation5 + $0x50] sm:$0xff]
    %v85 = vld [vmem:[#allocation5 + $0x58] sm:$0xff]
    %v86 = vld [vmem:[#allocation5 + $0x60] sm:$0xff]
    %v87 = vld [vmem:[#allocation5 + $0x68] sm:$0xff]
    %v88 = vld [vmem:[#allocation5 + $0x70] sm:$0xff]
    %v89 = vld [vmem:[#allocation5 + $0x78] sm:$0xff]
    %v90 = vld [vmem:[#allocation5 + $0x80] sm:$0xff]
    %v91 = vld [vmem:[#allocation5 + $0x88] sm:$0xff]
    %v92 = vld [vmem:[#allocation5 + $0x90] sm:$0xff]
    %v93 = vld [vmem:[#allocation5 + $0x98] sm:$0xff]
    %v94 = vld [vmem:[#allocation5 + $0xa0] sm:$0xff]
    %v95 = vld [vmem:[#allocation5 + $0xa8] sm:$0xff]
    %v96 = vld [vmem:[#allocation5 + $0xb0] sm:$0xff]
    %v97 = vld [vmem:[#allocation5 + $0xb8] sm:$0xff]
    %v98 = vld [vmem:[#allocation5 + $0xc0] sm:$0xff]
    %v99 = vld [vmem:[#allocation5 + $0xc8] sm:$0xff]
    %v100 = vld [vmem:[#allocation5 + $0xd0] sm:$0xff]
    %v101 = vld [vmem:[#allocation5 + $0xd8] sm:$0xff]
    %v102 = vld [vmem:[#allocation5 + $0xe0] sm:$0xff]
    %v103 = vld [vmem:[#allocation5 + $0xe8] sm:$0xff]
    %v104 = vld [vmem:[#allocation5 + $0xf0] sm:$0xff]
    %v105 = vld [vmem:[#allocation5 + $0xf8] sm:$0xff]
    %v106 = vld [vmem:[%s2] sm:$0x1]
    %v108 = vlaneseq
    %v109 = vshrl.u32 %v108, 7
    %v110 = vsub.s32 0, %v109
    %v111 = vrot.slane %v106, %v110
    %v115 = vunpack.c.l.s4 1983009808
    %v116 = vunpack.c.0.s8 %v115
    %v117 = vlaneseq
    %v118 = vshrl.u32 %v117, 7
    %v119 = vsub.s32 %v116, %v118
    %v120 = vrot.slane %v73, %v119
    %v121 = vcombine.high %v120, %v120
    %124 = vmatprep.subr.mxu0 0.0
    %125 = vmatpush1.msra.mxu0 %v74
    %126 = vmatprep.subr.mxu0 0.0
    %127 = vmatpush1.msra.mxu0 %v75
    %128 = vmatprep.subr.mxu0 0.0
    %129 = vmatpush1.msra.mxu0 %v76
    %130 = vmatprep.subr.mxu0 0.0
    %131 = vmatpush1.msra.mxu0 %v77
    %132 = vmatprep.subr.mxu0 0.0
    %133 = vmatpush1.msra.mxu0 %v78
    %134 = vmatprep.subr.mxu0 0.0
    %135 = vmatpush1.msra.mxu0 %v79
    %136 = vmatprep.subr.mxu0 0.0
    %137 = vmatpush1.msra.mxu0 %v80
    %138 = vmatprep.subr.mxu0 0.0
    %139 = vmatpush1.msra.mxu0 %v81
    %140 = vmatprep.subr.mxu0 0.0
    %141 = vmatpush1.msra.mxu0 %v82
    %142 = vmatprep.subr.mxu0 0.0
    %143 = vmatpush1.msra.mxu0 %v83
    %144 = vmatprep.subr.mxu0 0.0
    %145 = vmatpush1.msra.mxu0 %v84
    %146 = vmatprep.subr.mxu0 0.0
    %147 = vmatpush1.msra.mxu0 %v85
    %148 = vmatprep.subr.mxu0 0.0
    %149 = vmatpush1.msra.mxu0 %v86
    %150 = vmatprep.subr.mxu0 0.0
    %151 = vmatpush1.msra.mxu0 %v87
    %152 = vmatprep.subr.mxu0 0.0
    %153 = vmatpush1.msra.mxu0 %v88
    %154 = vmatprep.subr.mxu0 0.0
    %155 = vmatpush1.msra.mxu0 %v89
    %156 = vmatprep.subr.mxu0 0.0
    %157 = vmatpush1.msra.mxu0 %v90
    %158 = vmatprep.subr.mxu0 0.0
    %159 = vmatpush1.msra.mxu0 %v91
    %160 = vmatprep.subr.mxu0 0.0
    %161 = vmatpush1.msra.mxu0 %v92
    %162 = vmatprep.subr.mxu0 0.0
    %163 = vmatpush1.msra.mxu0 %v93
    %164 = vmatprep.subr.mxu0 0.0
    %165 = vmatpush1.msra.mxu0 %v94
    %166 = vmatprep.subr.mxu0 0.0
    %167 = vmatpush1.msra.mxu0 %v95
    %168 = vmatprep.subr.mxu0 0.0
    %169 = vmatpush1.msra.mxu0 %v96
    %170 = vmatprep.subr.mxu0 0.0
    %171 = vmatpush1.msra.mxu0 %v97
    %172 = vmatprep.subr.mxu0 0.0
    %173 = vmatpush1.msra.mxu0 %v98
    %174 = vmatprep.subr.mxu0 0.0
    %175 = vmatpush1.msra.mxu0 %v99
    %176 = vmatprep.subr.mxu0 0.0
    %177 = vmatpush1.msra.mxu0 %v100
    %178 = vmatprep.subr.mxu0 0.0
    %179 = vmatpush1.msra.mxu0 %v101
    %180 = vmatprep.subr.mxu0 0.0
    %181 = vmatpush1.msra.mxu0 %v102
    %182 = vmatprep.subr.mxu0 0.0
    %183 = vmatpush1.msra.mxu0 %v103
    %184 = vmatprep.subr.mxu0 0.0
    %185 = vmatpush1.msra.mxu0 %v104
    %186 = vmatprep.subr.mxu0 0.0
    %187 = vmatpush1.msra.mxu0 %v105
    %188 = vmatprep.mubr.f32.mxu0 %v121
    %189 = vmatmul.mubr.f32.gmra.mrb[0].mxu0 %v120
    %v190 = vpop.f32.mrb[0].mxu0
    %v191 = vadd.f32 %v111, %v190
    %v192 = vpop.f32.mrb[0].mxu0
    %193 = vdwg.mxu0
    %v194 = vmul.f32 %v191, 0.5
    %v195 = vmul.f32 %v191, 0.70710677
    %vm196 = vcmp.ge.f32.partialorder %v195, 0.0
    %v197 = vsel %vm196, 1.0, -1.0
    %v198 = vand.u32 2147483647, %v195
    %v199 = vmul.f32 %v198, 0.3275911
    %v200 = vadd.f32 %v199, 1.0
    %v201 = vrcp.pop %v200
    %v202 = vmul.f32 1.0, %v201
    %v203 = vmul.f32 %v202, 1.0614054
    %v204 = vadd.f32 %v203, -1.4531521
    %v205 = vmul.f32 %v204, %v202
    %v206 = vadd.f32 %v205, 1.4214138
    %v207 = vmul.f32 %v206, %v202
    %v208 = vadd.f32 %v207, -0.28449672
    %v209 = vmul.f32 %v208, %v202
    %v210 = vadd.f32 %v209, 0.2548296
    %v211 = vmul.f32 %v210, %v202
    %v212 = vsub.f32 0.0, %v198
    %v213 = vmul.f32 %v212, %v198
    %v214 = vmul.f32 %v213, 1.442695
    %v215 = vpow.pop %v214
    %v216 = vmul.f32 %v211, %v215
    %v217 = vsub.f32 1.0, %v216
    %v218 = vmul.f32 %v197, %v217
    %v219 = vadd.f32 %v218, 1.0
    %v220 = vmul.f32 %v194, %v219
    %v221 = vld [vmem:[%s3] sm:$0xff]
    %v222 = vld [vmem:[%s3 + $0x8] sm:$0xff]
    %v223 = vld [vmem:[%s3 + $0x10] sm:$0xff]
    %v224 = vld [vmem:[%s3 + $0x18] sm:$0xff]
    %v225 = vld [vmem:[%s3 + $0x20] sm:$0xff]
    %v226 = vld [vmem:[%s3 + $0x28] sm:$0xff]
    %v227 = vld [vmem:[%s3 + $0x30] sm:$0xff]
    %v228 = vld [vmem:[%s3 + $0x38] sm:$0xff]
    %v229 = vld [vmem:[%s3 + $0x40] sm:$0xff]
    %v230 = vld [vmem:[%s3 + $0x48] sm:$0xff]
    %v231 = vld [vmem:[%s3 + $0x50] sm:$0xff]
    %v232 = vld [vmem:[%s3 + $0x58] sm:$0xff]
    %v233 = vld [vmem:[%s3 + $0x60] sm:$0xff]
    %v234 = vld [vmem:[%s3 + $0x68] sm:$0xff]
    %v235 = vld [vmem:[%s3 + $0x70] sm:$0xff]
    %v236 = vld [vmem:[%s3 + $0x78] sm:$0xff]
    %v237 = vld [vmem:[%s4] sm:$0x1]
    %v239 = vlaneseq
    %v240 = vshrl.u32 %v239, 7
    %v241 = vsub.s32 0, %v240
    %v242 = vrot.slane %v237, %v241
    %244 = vmatprep.subr.mxu0 0.0
    %245 = vmatpush1.msra.mxu0 %v221
    %246 = vmatprep.subr.mxu0 0.0
    %247 = vmatpush1.msra.mxu0 %v222
    %248 = vmatprep.subr.mxu0 0.0
    %249 = vmatpush1.msra.mxu0 %v223
    %250 = vmatprep.subr.mxu0 0.0
    %251 = vmatpush1.msra.mxu0 %v224
    %252 = vmatprep.subr.mxu0 0.0
    %253 = vmatpush1.msra.mxu0 %v225
    %254 = vmatprep.subr.mxu0 0.0
    %255 = vmatpush1.msra.mxu0 %v226
    %256 = vmatprep.subr.mxu0 0.0
    %257 = vmatpush1.msra.mxu0 %v227
    %258 = vmatprep.subr.mxu0 0.0
    %259 = vmatpush1.msra.mxu0 %v228
    %260 = vmatprep.subr.mxu0 0.0
    %261 = vmatpush1.msra.mxu0 %v229
    %262 = vmatprep.subr.mxu0 0.0
    %263 = vmatpush1.msra.mxu0 %v230
    %264 = vmatprep.subr.mxu0 0.0
    %265 = vmatpush1.msra.mxu0 %v231
    %266 = vmatprep.subr.mxu0 0.0
    %267 = vmatpush1.msra.mxu0 %v232
    %268 = vmatprep.subr.mxu0 0.0
    %269 = vmatpush1.msra.mxu0 %v233
    %270 = vmatprep.subr.mxu0 0.0
    %271 = vmatpush1.msra.mxu0 %v234
    %272 = vmatprep.subr.mxu0 0.0
    %273 = vmatpush1.msra.mxu0 %v235
    %274 = vmatprep.subr.mxu0 0.0
    %275 = vmatpush1.msra.mxu0 %v236
    %276 = vmatprep.subr.mxu0 0.0
    %277 = vmatpush1.msra.mxu0 0.0
    %278 = vmatprep.subr.mxu0 0.0
    %279 = vmatpush1.msra.mxu0 0.0
    %280 = vmatprep.subr.mxu0 0.0
    %281 = vmatpush1.msra.mxu0 0.0
    %282 = vmatprep.subr.mxu0 0.0
    %283 = vmatpush1.msra.mxu0 0.0
    %284 = vmatprep.subr.mxu0 0.0
    %285 = vmatpush1.msra.mxu0 0.0
    %286 = vmatprep.subr.mxu0 0.0
    %287 = vmatpush1.msra.mxu0 0.0
    %288 = vmatprep.subr.mxu0 0.0
    %289 = vmatpush1.msra.mxu0 0.0
    %290 = vmatprep.subr.mxu0 0.0
    %291 = vmatpush1.msra.mxu0 0.0
    %292 = vmatprep.subr.mxu0 0.0
    %293 = vmatpush1.msra.mxu0 0.0
    %294 = vmatprep.subr.mxu0 0.0
    %295 = vmatpush1.msra.mxu0 0.0
    %296 = vmatprep.subr.mxu0 0.0
    %297 = vmatpush1.msra.mxu0 0.0
    %298 = vmatprep.subr.mxu0 0.0
    %299 = vmatpush1.msra.mxu0 0.0
    %300 = vmatprep.subr.mxu0 0.0
    %301 = vmatpush1.msra.mxu0 0.0
    %302 = vmatprep.subr.mxu0 0.0
    %303 = vmatpush1.msra.mxu0 0.0
    %304 = vmatprep.subr.mxu0 0.0
    %305 = vmatpush1.msra.mxu0 0.0
    %306 = vmatprep.subr.mxu0 0.0
    %307 = vmatpush1.msra.mxu0 0.0
    %308 = vmatprep.mubr.f32.mxu0 0.0
    %309 = vmatmul.mubr.f32.gmra.mrb[0].mxu0 %v220
    %v310 = vpop.f32.mrb[0].mxu0
    %v311 = vadd.f32 %v242, %v310
    %v312 = vpop.f32.mrb[0].mxu0
    %313 = vdwg.mxu0
    %v314 = vmul.f32 %v311, 0.5
    %v315 = vmul.f32 %v311, 0.70710677
    %vm316 = vcmp.ge.f32.partialorder %v315, 0.0
    %v317 = vsel %vm316, 1.0, -1.0
    %v318 = vand.u32 2147483647, %v315
    %v319 = vmul.f32 %v318, 0.3275911
    %v320 = vadd.f32 %v319, 1.0
    %v321 = vrcp.pop %v320
    %v322 = vmul.f32 1.0, %v321
    %v323 = vmul.f32 %v322, 1.0614054
    %v324 = vadd.f32 %v323, -1.4531521
    %v325 = vmul.f32 %v324, %v322
    %v326 = vadd.f32 %v325, 1.4214138
    %v327 = vmul.f32 %v326, %v322
    %v328 = vadd.f32 %v327, -0.28449672
    %v329 = vmul.f32 %v328, %v322
    %v330 = vadd.f32 %v329, 0.2548296
    %v331 = vmul.f32 %v330, %v322
    %v332 = vsub.f32 0.0, %v318
    %v333 = vmul.f32 %v332, %v318
    %v334 = vmul.f32 %v333, 1.442695
    %v335 = vpow.pop %v334
    %v336 = vmul.f32 %v331, %v335
    %v337 = vsub.f32 1.0, %v336
    %v338 = vmul.f32 %v317, %v337
    %v339 = vadd.f32 %v338, 1.0
    %v340 = vmul.f32 %v314, %v339
    %v341 = vld [vmem:[%s5] sm:$0xff]
    %v342 = vld [vmem:[%s5 + $0x8] sm:$0xff]
    %v343 = vld [vmem:[%s5 + $0x10] sm:$0xff]
    %v344 = vld [vmem:[%s5 + $0x18] sm:$0xff]
    %v345 = vld [vmem:[%s5 + $0x20] sm:$0xff]
    %v346 = vld [vmem:[%s5 + $0x28] sm:$0xff]
    %v347 = vld [vmem:[%s5 + $0x30] sm:$0xff]
    %v348 = vld [vmem:[%s5 + $0x38] sm:$0xff]
    %v349 = vld [vmem:[%s5 + $0x40] sm:$0xff]
    %v350 = vld [vmem:[%s5 + $0x48] sm:$0xff]
    %v351 = vld [vmem:[%s5 + $0x50] sm:$0xff]
    %v352 = vld [vmem:[%s5 + $0x58] sm:$0xff]
    %v353 = vld [vmem:[%s5 + $0x60] sm:$0xff]
    %v354 = vld [vmem:[%s5 + $0x68] sm:$0xff]
    %v355 = vld [vmem:[%s5 + $0x70] sm:$0xff]
    %v356 = vld [vmem:[%s5 + $0x78] sm:$0xff]
    %v357 = vld [vmem:[#allocation7] sm:$0x1]
    %v359 = vlaneseq
    %v360 = vshrl.u32 %v359, 7
    %v361 = vsub.s32 0, %v360
    %v362 = vrot.slane %v357, %v361
    %364 = vmatprep.subr.mxu0 0.0
    %365 = vmatpush1.msra.mxu0 %v341
    %366 = vmatprep.subr.mxu0 0.0
    %367 = vmatpush1.msra.mxu0 %v342
    %368 = vmatprep.subr.mxu0 0.0
    %369 = vmatpush1.msra.mxu0 %v343
    %370 = vmatprep.subr.mxu0 0.0
    %371 = vmatpush1.msra.mxu0 %v344
    %372 = vmatprep.subr.mxu0 0.0
    %373 = vmatpush1.msra.mxu0 %v345
    %374 = vmatprep.subr.mxu0 0.0
    %375 = vmatpush1.msra.mxu0 %v346
    %376 = vmatprep.subr.mxu0 0.0
    %377 = vmatpush1.msra.mxu0 %v347
    %378 = vmatprep.subr.mxu0 0.0
    %379 = vmatpush1.msra.mxu0 %v348
    %380 = vmatprep.subr.mxu0 0.0
    %381 = vmatpush1.msra.mxu0 %v349
    %382 = vmatprep.subr.mxu0 0.0
    %383 = vmatpush1.msra.mxu0 %v350
    %384 = vmatprep.subr.mxu0 0.0
    %385 = vmatpush1.msra.mxu0 %v351
    %386 = vmatprep.subr.mxu0 0.0
    %387 = vmatpush1.msra.mxu0 %v352
    %388 = vmatprep.subr.mxu0 0.0
    %389 = vmatpush1.msra.mxu0 %v353
    %390 = vmatprep.subr.mxu0 0.0
    %391 = vmatpush1.msra.mxu0 %v354
    %392 = vmatprep.subr.mxu0 0.0
    %393 = vmatpush1.msra.mxu0 %v355
    %394 = vmatprep.subr.mxu0 0.0
    %395 = vmatpush1.msra.mxu0 %v356
    %396 = vmatprep.subr.mxu0 0.0
    %397 = vmatpush1.msra.mxu0 0.0
    %398 = vmatprep.subr.mxu0 0.0
    %399 = vmatpush1.msra.mxu0 0.0
    %400 = vmatprep.subr.mxu0 0.0
    %401 = vmatpush1.msra.mxu0 0.0
    %402 = vmatprep.subr.mxu0 0.0
    %403 = vmatpush1.msra.mxu0 0.0
    %404 = vmatprep.subr.mxu0 0.0
    %405 = vmatpush1.msra.mxu0 0.0
    %406 = vmatprep.subr.mxu0 0.0
    %407 = vmatpush1.msra.mxu0 0.0
    %408 = vmatprep.subr.mxu0 0.0
    %409 = vmatpush1.msra.mxu0 0.0
    %410 = vmatprep.subr.mxu0 0.0
    %411 = vmatpush1.msra.mxu0 0.0
    %412 = vmatprep.subr.mxu0 0.0
    %413 = vmatpush1.msra.mxu0 0.0
    %414 = vmatprep.subr.mxu0 0.0
    %415 = vmatpush1.msra.mxu0 0.0
    %416 = vmatprep.subr.mxu0 0.0
    %417 = vmatpush1.msra.mxu0 0.0
    %418 = vmatprep.subr.mxu0 0.0
    %419 = vmatpush1.msra.mxu0 0.0
    %420 = vmatprep.subr.mxu0 0.0
    %421 = vmatpush1.msra.mxu0 0.0
    %422 = vmatprep.subr.mxu0 0.0
    %423 = vmatpush1.msra.mxu0 0.0
    %424 = vmatprep.subr.mxu0 0.0
    %425 = vmatpush1.msra.mxu0 0.0
    %426 = vmatprep.subr.mxu0 0.0
    %427 = vmatpush1.msra.mxu0 0.0
    %428 = vmatprep.mubr.f32.mxu0 0.0
    %429 = vmatmul.mubr.f32.gmra.mrb[0].mxu0 %v340
    %v430 = vpop.f32.mrb[0].mxu0
    %v431 = vadd.f32 %v362, %v430
    %v432 = vpop.f32.mrb[0].mxu0
    %433 = vdwg.mxu0
    %v434 = vmul.f32 %v431, 0.1
    %vm435 = vcmask 25600
    %v436 = vsel %vm435, %v434, -inf
    %437 = vmax.xlane.f32.xlu0 %v436
    %v438 = vpop.xlane.xlu0 %437
    %v439 = vsub.f32 %v434, %v438
    %v440 = vmul.f32 %v439, 1.442695
    %v441 = vpow.pop %v440
    %v442 = vsel %vm435, %v441, 0.0
    %443 = vadd.xlane.f32.xlu0 %v442
    %v444 = vpop.xlane.xlu0 %443
    %v445 = vrcp.pop %v444
    %v446 = vmul.f32 %v441, %v445
    %v447 = vld [vmem:[%s7] sm:$0xff]
    %v448 = vld [vmem:[%s7 + $0x8] sm:$0xff]
    %v449 = vld [vmem:[%s7 + $0x10] sm:$0xf]
    %v453 = vcombine.high %v447, %v447
    %v454 = vcombine.high %v448, %v448
    %vm455 = vcmask 31744
    %v457 = vsel %vm455, %v446, 0
    %vm459 = vcmask 1043456
    %v460 = vsel %vm459, %v447, 0
    %v462 = vsel %vm459, %v453, 0
    %v464 = vsel %vm459, %v448, 0
    %v466 = vsel %vm459, %v454, 0
    %v468 = vsel %vm459, %v449, 0
    %470 = vmatprep.subr.mxu0 %v462
    %471 = vmatpush1.msra.mxu0 %v460
    %472 = vmatprep.subr.mxu0 0.0
    %473 = vmatpush1.msra.mxu0 0.0
    %474 = vmatprep.subr.mxu0 0.0
    %475 = vmatpush1.msra.mxu0 0.0
    %476 = vmatprep.subr.mxu0 0.0
    %477 = vmatpush1.msra.mxu0 0.0
    %478 = vmatprep.subr.mxu0 0.0
    %479 = vmatpush1.msra.mxu0 0.0
    %480 = vmatprep.subr.mxu0 0.0
    %481 = vmatpush1.msra.mxu0 0.0
    %482 = vmatprep.subr.mxu0 0.0
    %483 = vmatpush1.msra.mxu0 0.0
    %484 = vmatprep.subr.mxu0 0.0
    %485 = vmatpush1.msra.mxu0 0.0
    %486 = vmatprep.subr.mxu0 0.0
    %487 = vmatpush1.msra.mxu0 0.0
    %488 = vmatprep.subr.mxu0 0.0
    %489 = vmatpush1.msra.mxu0 0.0
    %490 = vmatprep.subr.mxu0 0.0
    %491 = vmatpush1.msra.mxu0 0.0
    %492 = vmatprep.subr.mxu0 0.0
    %493 = vmatpush1.msra.mxu0 0.0
    %494 = vmatprep.subr.mxu0 0.0
    %495 = vmatpush1.msra.mxu0 0.0
    %496 = vmatprep.subr.mxu0 0.0
    %497 = vmatpush1.msra.mxu0 0.0
    %498 = vmatprep.subr.mxu0 0.0
    %499 = vmatpush1.msra.mxu0 0.0
    %500 = vmatprep.subr.mxu0 0.0
    %501 = vmatpush1.msra.mxu0 0.0
    %502 = vmatprep.subr.mxu0 0.0
    %503 = vmatpush1.msra.mxu0 0.0
    %504 = vmatprep.subr.mxu0 0.0
    %505 = vmatpush1.msra.mxu0 0.0
    %506 = vmatprep.subr.mxu0 0.0
    %507 = vmatpush1.msra.mxu0 0.0
    %508 = vmatprep.subr.mxu0 0.0
    %509 = vmatpush1.msra.mxu0 0.0
    %510 = vmatprep.subr.mxu0 0.0
    %511 = vmatpush1.msra.mxu0 0.0
    %512 = vmatprep.subr.mxu0 0.0
    %513 = vmatpush1.msra.mxu0 0.0
    %514 = vmatprep.subr.mxu0 0.0
    %515 = vmatpush1.msra.mxu0 0.0
    %516 = vmatprep.subr.mxu0 0.0
    %517 = vmatpush1.msra.mxu0 0.0
    %518 = vmatprep.subr.mxu0 0.0
    %519 = vmatpush1.msra.mxu0 0.0
    %520 = vmatprep.subr.mxu0 0.0
    %521 = vmatpush1.msra.mxu0 0.0
    %522 = vmatprep.subr.mxu0 0.0
    %523 = vmatpush1.msra.mxu0 0.0
    %524 = vmatprep.subr.mxu0 0.0
    %525 = vmatpush1.msra.mxu0 0.0
    %526 = vmatprep.subr.mxu0 0.0
    %527 = vmatpush1.msra.mxu0 0.0
    %528 = vmatprep.subr.mxu0 0.0
    %529 = vmatpush1.msra.mxu0 0.0
    %530 = vmatprep.subr.mxu0 0.0
    %531 = vmatpush1.msra.mxu0 0.0
    %532 = vmatprep.subr.mxu0 0.0
    %533 = vmatpush1.msra.mxu0 0.0
    %534 = vmatprep.mubr.f32.mxu0 0.0
    %535 = vmatmul.mubr.f32.gmra.mrb[0].mxu0 %v457
    %v536 = vpop.f32.mrb[0].mxu0
    %v537 = vadd.f32 0.0, %v536
    %v538 = vpop.f32.mrb[0].mxu0
    %v539 = vadd.f32 0.0, %v538
    %540 = vdwg.mxu0
    %541 = vmatprep.subr.mxu0 %v466
    %542 = vmatpush1.msra.mxu0 %v464
    %543 = vmatprep.subr.mxu0 0.0
    %544 = vmatpush1.msra.mxu0 0.0
    %545 = vmatprep.subr.mxu0 0.0
    %546 = vmatpush1.msra.mxu0 0.0
    %547 = vmatprep.subr.mxu0 0.0
    %548 = vmatpush1.msra.mxu0 0.0
    %549 = vmatprep.subr.mxu0 0.0
    %550 = vmatpush1.msra.mxu0 0.0
    %551 = vmatprep.subr.mxu0 0.0
    %552 = vmatpush1.msra.mxu0 0.0
    %553 = vmatprep.subr.mxu0 0.0
    %554 = vmatpush1.msra.mxu0 0.0
    %555 = vmatprep.subr.mxu0 0.0
    %556 = vmatpush1.msra.mxu0 0.0
    %557 = vmatprep.subr.mxu0 0.0
    %558 = vmatpush1.msra.mxu0 0.0
    %559 = vmatprep.subr.mxu0 0.0
    %560 = vmatpush1.msra.mxu0 0.0
    %561 = vmatprep.subr.mxu0 0.0
    %562 = vmatpush1.msra.mxu0 0.0
    %563 = vmatprep.subr.mxu0 0.0
    %564 = vmatpush1.msra.mxu0 0.0
    %565 = vmatprep.subr.mxu0 0.0
    %566 = vmatpush1.msra.mxu0 0.0
    %567 = vmatprep.subr.mxu0 0.0
    %568 = vmatpush1.msra.mxu0 0.0
    %569 = vmatprep.subr.mxu0 0.0
    %570 = vmatpush1.msra.mxu0 0.0
    %571 = vmatprep.subr.mxu0 0.0
    %572 = vmatpush1.msra.mxu0 0.0
    %573 = vmatprep.subr.mxu0 0.0
    %574 = vmatpush1.msra.mxu0 0.0
    %575 = vmatprep.subr.mxu0 0.0
    %576 = vmatpush1.msra.mxu0 0.0
    %577 = vmatprep.subr.mxu0 0.0
    %578 = vmatpush1.msra.mxu0 0.0
    %579 = vmatprep.subr.mxu0 0.0
    %580 = vmatpush1.msra.mxu0 0.0
    %581 = vmatprep.subr.mxu0 0.0
    %582 = vmatpush1.msra.mxu0 0.0
    %583 = vmatprep.subr.mxu0 0.0
    %584 = vmatpush1.msra.mxu0 0.0
    %585 = vmatprep.subr.mxu0 0.0
    %586 = vmatpush1.msra.mxu0 0.0
    %587 = vmatprep.subr.mxu0 0.0
    %588 = vmatpush1.msra.mxu0 0.0
    %589 = vmatprep.subr.mxu0 0.0
    %590 = vmatpush1.msra.mxu0 0.0
    %591 = vmatprep.subr.mxu0 0.0
    %592 = vmatpush1.msra.mxu0 0.0
    %593 = vmatprep.subr.mxu0 0.0
    %594 = vmatpush1.msra.mxu0 0.0
    %595 = vmatprep.subr.mxu0 0.0
    %596 = vmatpush1.msra.mxu0 0.0
    %597 = vmatprep.subr.mxu0 0.0
    %598 = vmatpush1.msra.mxu0 0.0
    %599 = vmatprep.subr.mxu0 0.0
    %600 = vmatpush1.msra.mxu0 0.0
    %601 = vmatprep.subr.mxu0 0.0
    %602 = vmatpush1.msra.mxu0 0.0
    %603 = vmatprep.subr.mxu0 0.0
    %604 = vmatpush1.msra.mxu0 0.0
    %605 = vmatprep.mubr.f32.mxu0 0.0
    %606 = vmatmul.mubr.f32.gmra.mrb[0].mxu0 %v457
    %v607 = vpop.f32.mrb[0].mxu0
    %v608 = vadd.f32 0.0, %v607
    %v609 = vpop.f32.mrb[0].mxu0
    %v610 = vadd.f32 0.0, %v609
    %611 = vdwg.mxu0
    %612 = vmatprep.subr.mxu0 0.0
    %613 = vmatpush1.msra.mxu0 %v468
    %614 = vmatprep.subr.mxu0 0.0
    %615 = vmatpush1.msra.mxu0 0.0
    %616 = vmatprep.subr.mxu0 0.0
    %617 = vmatpush1.msra.mxu0 0.0
    %618 = vmatprep.subr.mxu0 0.0
    %619 = vmatpush1.msra.mxu0 0.0
    %620 = vmatprep.subr.mxu0 0.0
    %621 = vmatpush1.msra.mxu0 0.0
    %622 = vmatprep.subr.mxu0 0.0
    %623 = vmatpush1.msra.mxu0 0.0
    %624 = vmatprep.subr.mxu0 0.0
    %625 = vmatpush1.msra.mxu0 0.0
    %626 = vmatprep.subr.mxu0 0.0
    %627 = vmatpush1.msra.mxu0 0.0
    %628 = vmatprep.subr.mxu0 0.0
    %629 = vmatpush1.msra.mxu0 0.0
    %630 = vmatprep.subr.mxu0 0.0
    %631 = vmatpush1.msra.mxu0 0.0
    %632 = vmatprep.subr.mxu0 0.0
    %633 = vmatpush1.msra.mxu0 0.0
    %634 = vmatprep.subr.mxu0 0.0
    %635 = vmatpush1.msra.mxu0 0.0
    %636 = vmatprep.subr.mxu0 0.0
    %637 = vmatpush1.msra.mxu0 0.0
    %638 = vmatprep.subr.mxu0 0.0
    %639 = vmatpush1.msra.mxu0 0.0
    %640 = vmatprep.subr.mxu0 0.0
    %641 = vmatpush1.msra.mxu0 0.0
    %642 = vmatprep.subr.mxu0 0.0
    %643 = vmatpush1.msra.mxu0 0.0
    %644 = vmatprep.subr.mxu0 0.0
    %645 = vmatpush1.msra.mxu0 0.0
    %646 = vmatprep.subr.mxu0 0.0
    %647 = vmatpush1.msra.mxu0 0.0
    %648 = vmatprep.subr.mxu0 0.0
    %649 = vmatpush1.msra.mxu0 0.0
    %650 = vmatprep.subr.mxu0 0.0
    %651 = vmatpush1.msra.mxu0 0.0
    %652 = vmatprep.subr.mxu0 0.0
    %653 = vmatpush1.msra.mxu0 0.0
    %654 = vmatprep.subr.mxu0 0.0
    %655 = vmatpush1.msra.mxu0 0.0
    %656 = vmatprep.subr.mxu0 0.0
    %657 = vmatpush1.msra.mxu0 0.0
    %658 = vmatprep.subr.mxu0 0.0
    %659 = vmatpush1.msra.mxu0 0.0
    %660 = vmatprep.subr.mxu0 0.0
    %661 = vmatpush1.msra.mxu0 0.0
    %662 = vmatprep.subr.mxu0 0.0
    %663 = vmatpush1.msra.mxu0 0.0
    %664 = vmatprep.subr.mxu0 0.0
    %665 = vmatpush1.msra.mxu0 0.0
    %666 = vmatprep.subr.mxu0 0.0
    %667 = vmatpush1.msra.mxu0 0.0
    %668 = vmatprep.subr.mxu0 0.0
    %669 = vmatpush1.msra.mxu0 0.0
    %670 = vmatprep.subr.mxu0 0.0
    %671 = vmatpush1.msra.mxu0 0.0
    %672 = vmatprep.subr.mxu0 0.0
    %673 = vmatpush1.msra.mxu0 0.0
    %674 = vmatprep.subr.mxu0 0.0
    %675 = vmatpush1.msra.mxu0 0.0
    %676 = vmatprep.mubr.f32.mxu0 0.0
    %677 = vmatmul.mubr.f32.gmra.mrb[0].mxu0 %v457
    %v678 = vpop.f32.mrb[0].mxu0
    %v679 = vadd.f32 0.0, %v678
    %v680 = vpop.f32.mrb[0].mxu0
    %681 = vdwg.mxu0
    %v687 = vcombine.low %v537, %v539
    %v688 = vcombine.low %v608, %v610
    %v690 = vunpack.c.l.s4 1983009808
    %v691 = vunpack.c.0.s8 %v690
    %v692 = vlaneseq
    %v693 = vshrl.u32 %v692, 7
    %v694 = vsub.s32 %v691, %v693
    %v695 = vrot.slane %v687, %v694
    %v697 = vunpack.c.l.s4 1983009808
    %v698 = vunpack.c.0.s8 %v697
    %v699 = vlaneseq
    %v700 = vshrl.u32 %v699, 7
    %v701 = vsub.s32 %v698, %v700
    %v702 = vrot.slane %v688, %v701
    %v703 = vcombine.low %v695, %v702
    %v705 = vunpack.c.l.s4 1983009808
    %v706 = vunpack.c.0.s8 %v705
    %v707 = vlaneseq
    %v708 = vshrl.u32 %v707, 7
    %v709 = vsub.s32 %v706, %v708
    %v710 = vrot.slane %v679, %v709
    %713 = vst [vmem:[#allocation8] sm:$0xff] %v703
    %714 = vst [vmem:[#allocation8 + $0x8] sm:$0x3] %v710
    %v715 = vld [vmem:[%s8] sm:$0xf]
    %v717 = vsel %vm459, %v715, 0
    %719 = vmatprep.subr.mxu0 0.0
    %720 = vmatpush1.msra.mxu0 %v717
    %721 = vmatprep.subr.mxu0 0.0
    %722 = vmatpush1.msra.mxu0 0.0
    %723 = vmatprep.subr.mxu0 0.0
    %724 = vmatpush1.msra.mxu0 0.0
    %725 = vmatprep.subr.mxu0 0.0
    %726 = vmatpush1.msra.mxu0 0.0
    %727 = vmatprep.subr.mxu0 0.0
    %728 = vmatpush1.msra.mxu0 0.0
    %729 = vmatprep.subr.mxu0 0.0
    %730 = vmatpush1.msra.mxu0 0.0
    %731 = vmatprep.subr.mxu0 0.0
    %732 = vmatpush1.msra.mxu0 0.0
    %733 = vmatprep.subr.mxu0 0.0
    %734 = vmatpush1.msra.mxu0 0.0
    %735 = vmatprep.subr.mxu0 0.0
    %736 = vmatpush1.msra.mxu0 0.0
    %737 = vmatprep.subr.mxu0 0.0
    %738 = vmatpush1.msra.mxu0 0.0
    %739 = vmatprep.subr.mxu0 0.0
    %740 = vmatpush1.msra.mxu0 0.0
    %741 = vmatprep.subr.mxu0 0.0
    %742 = vmatpush1.msra.mxu0 0.0
    %743 = vmatprep.subr.mxu0 0.0
    %744 = vmatpush1.msra.mxu0 0.0
    %745 = vmatprep.subr.mxu0 0.0
    %746 = vmatpush1.msra.mxu0 0.0
    %747 = vmatprep.subr.mxu0 0.0
    %748 = vmatpush1.msra.mxu0 0.0
    %749 = vmatprep.subr.mxu0 0.0
    %750 = vmatpush1.msra.mxu0 0.0
    %751 = vmatprep.subr.mxu0 0.0
    %752 = vmatpush1.msra.mxu0 0.0
    %753 = vmatprep.subr.mxu0 0.0
    %754 = vmatpush1.msra.mxu0 0.0
    %755 = vmatprep.subr.mxu0 0.0
    %756 = vmatpush1.msra.mxu0 0.0
    %757 = vmatprep.subr.mxu0 0.0
    %758 = vmatpush1.msra.mxu0 0.0
    %759 = vmatprep.subr.mxu0 0.0
    %760 = vmatpush1.msra.mxu0 0.0
    %761 = vmatprep.subr.mxu0 0.0
    %762 = vmatpush1.msra.mxu0 0.0
    %763 = vmatprep.subr.mxu0 0.0
    %764 = vmatpush1.msra.mxu0 0.0
    %765 = vmatprep.subr.mxu0 0.0
    %766 = vmatpush1.msra.mxu0 0.0
    %767 = vmatprep.subr.mxu0 0.0
    %768 = vmatpush1.msra.mxu0 0.0
    %769 = vmatprep.subr.mxu0 0.0
    %770 = vmatpush1.msra.mxu0 0.0
    %771 = vmatprep.subr.mxu0 0.0
    %772 = vmatpush1.msra.mxu0 0.0
    %773 = vmatprep.subr.mxu0 0.0
    %774 = vmatpush1.msra.mxu0 0.0
    %775 = vmatprep.subr.mxu0 0.0
    %776 = vmatpush1.msra.mxu0 0.0
    %777 = vmatprep.subr.mxu0 0.0
    %778 = vmatpush1.msra.mxu0 0.0
    %779 = vmatprep.subr.mxu0 0.0
    %780 = vmatpush1.msra.mxu0 0.0
    %781 = vmatprep.subr.mxu0 0.0
    %782 = vmatpush1.msra.mxu0 0.0
    %783 = vmatprep.mubr.f32.mxu0 0.0
    %784 = vmatmul.mubr.f32.gmra.mrb[0].mxu0 %v457
    %v785 = vpop.f32.mrb[0].mxu0
    %v786 = vadd.f32 0.0, %v785
    %v787 = vpop.f32.mrb[0].mxu0
    %788 = vdwg.mxu0
    %vm789 = vcmask 254976
    %790 = vst.msk [vmem:[#allocation9] sm:$0x3] %vm789, %v786
    // Predicated region
    $region50: #{tpu_custom_call.1} parent=1 // pred_check
      _
    $region51: #{tpu_custom_call.1} parent=1 // pred_check_branch
      %792 = sbr.rel (0) target = $region53
    $region52: #{tpu_custom_call.1} parent=1 // pred_region
      %s794 = ssub.s32 160, 160
      %795 = vsyncadd [#allocation4], %s794
      %s797 = sshll.u32 [#allocation8], 4
      %s798 = int_to_ptr.vmem [resolvable:$true] %s797
      %800 = dma.vmem_to_hbm [thread:$0]  %s798, 160, %s9, [#allocation4]
    $region53: #{tpu_custom_call.1} parent=1 // pred_fallthru
      _
    // Predicated region
    $region54: #{tpu_custom_call.1} parent=1 // pred_check
      _
    $region55: #{tpu_custom_call.1} parent=1 // pred_check_branch
      %802 = sbr.rel (0) target = $region57
    $region56: #{tpu_custom_call.1} parent=1 // pred_region
      %s804 = ssub.s32 32, 32
      %805 = vsyncadd [#allocation10], %s804
      %s807 = sshll.u32 [#allocation9], 4
      %s808 = int_to_ptr.vmem [resolvable:$true] %s807
      %810 = dma.vmem_to_hbm [thread:$0]  %s808, 32, %s10, [#allocation10]
    $region57: #{tpu_custom_call.1} parent=1 // pred_fallthru
      _
    // Predicated region
    $region58: #{tpu_custom_call.1} parent=1 // pred_check
      _
    $region59: #{tpu_custom_call.1} parent=1 // pred_check_branch
      %812 = sbr.rel (0) target = $region61
    $region60: #{tpu_custom_call.1} parent=1 // pred_region
      %813 = dma.done [#allocation4], 160
    $region61: #{tpu_custom_call.1} parent=1 // pred_fallthru
      _
    // Predicated region
    $region62: #{tpu_custom_call.1} parent=1 // pred_check
      _
    $region63: #{tpu_custom_call.1} parent=1 // pred_check_branch
      %815 = sbr.rel (0) target = $region65
    $region64: #{tpu_custom_call.1} parent=1 // pred_region
      %816 = dma.done [#allocation10], 32
    $region65: #{tpu_custom_call.1} parent=1 // pred_fallthru
      _
    %817 = vsyncpa [#allocation3], 1
    %818 = vsyncpa [#allocation6], 1
    %819 = vsyncpa [#allocation4], 1
    %820 = vsyncpa [#allocation10], 1

</llo_original>
